<compile_context>
chip_gen: v5e
topology: v5e:2x2
jax: 0.10.0
libtpu: 0.0.40
codegen_flags: <defaults>
</compile_context>

<pallas_src>
import functools

import jax
import jax.numpy as jnp
from jax.experimental import pallas as pl
from jax.experimental.pallas import tpu as pltpu


def _round_up(x, m):
    return (x + m - 1) // m * m


def _multi_core_chip():
    """True on chips with >1 TensorCore per device (v7x); False on v5e/v6e."""
    try:
        kind = jax.devices()[0].device_kind.lower()
        return "v7" in kind
    except Exception:
        return False


def _batch_dim_semantics(multi_core):
    """CORE_PARALLEL shards the batch grid axis across v7x's two TensorCores.

    On single-TC chips "parallel" vs "arbitrary" has no measured codegen
    impact, so the fallback is just the safe default.
    """
    if multi_core:
        cp = getattr(pltpu, "CORE_PARALLEL", None)
        if cp is not None:
            return (cp,)
    return ("parallel",)


def _mlp_kernel(x_ref, w1_ref, b1_ref, w2_ref, b2_ref, w3_ref, b3_ref, o_ref):
    """Fused 3-layer MLP on one [tb, in_dims] batch tile.

    x_ref  : [tb, in_dims]   float32 state tile
    w*_ref : [in, out]       compute dtype (f32 or bf16), un-padded
    b*_ref : [1, out]        float32
    o_ref  : [tb, n_actions] float32
    """
    cdt = w1_ref.dtype
    x = x_ref[...].astype(cdt)  # single cast, done in-kernel (no wrapper pass)

    # Layer 1: MXU matmul (f32 accumulate) + f32 bias add + f32 ReLU (v5e-safe).
    h1 = jnp.dot(x, w1_ref[...], preferred_element_type=jnp.float32) + b1_ref[...]
    h1 = jnp.maximum(h1, 0.0).astype(cdt)

    # Layer 2.
    h2 = jnp.dot(h1, w2_ref[...], preferred_element_type=jnp.float32) + b2_ref[...]
    h2 = jnp.maximum(h2, 0.0).astype(cdt)

    # Layer 3 (no activation); store only the real n_actions lanes.
    o_ref[...] = (jnp.dot(h2, w3_ref[...], preferred_element_type=jnp.float32)
                  + b3_ref[...]).astype(o_ref.dtype)


def prepare_params(params, compute_dtype=jnp.float32):
    """Cast weights to the compute dtype; reshape biases to [1, out] float32.

    No padding / packing: parameters total ~5 KB and are kept VMEM-resident by
    grid-invariant BlockSpecs, so DMA count/size is a non-issue.  The bf16
    path is valid on v5e as well (its MXU is bf16-native; all element-wise
    work stays f32 inside the kernel).
    """
    cast_w = lambda w: jnp.asarray(w, jnp.float32).astype(compute_dtype)
    cast_b = lambda b: jnp.asarray(b, jnp.float32).reshape(1, -1)
    return (cast_w(params["w1"]), cast_b(params["b1"]),
            cast_w(params["w2"]), cast_b(params["b2"]),
            cast_w(params["w3"]), cast_b(params["b3"]))


@functools.partial(jax.jit, static_argnames=("block_batch",))
def generic_network_forward(state, prepared, *, block_batch=1024):
    """state: [B, input_dims] float32 -> [B, n_actions] float32."""
    w1, b1, w2, b2, w3, b3 = prepared
    B, in_dims = state.shape
    n_actions = w3.shape[1]

    multi_core = _multi_core_chip()

    # Batch tiling: fewest tiles of roughly equal size (minimizes padded rows),
    # rounded to 8 sublanes (all batch-tiled refs are f32).  On multi-TC chips
    # force >=2 tiles for non-trivial batches so CORE_PARALLEL engages both TCs.
    nt = max(1, pl.cdiv(B, block_batch))
    if multi_core and nt == 1 and B >= 64:
        nt = 2
    if nt == 1:
        tb = B  # block == full array: always a legal block shape
    else:
        tb = _round_up(pl.cdiv(B, nt), 8)
        nt = pl.cdiv(B, tb)

    # Modest, explicit VMEM budget (real footprint is well under a few MiB on
    # any generation, incl. v7x's 64 MiB physical / 32 MiB scoped default).
    param_bytes = sum(int(a.size) * jnp.dtype(a.dtype).itemsize
                      for a in (w1, b1, w2, b2, w3, b3))
    est = (2 * tb * max(in_dims, 8) * 4          # double-buffered input tile
           + 2 * tb * max(n_actions, 8) * 4      # double-buffered output tile
           + 4 * tb * 128 * 4                    # f32 intermediates / spill headroom
           + 2 * param_bytes + 64 * 1024)
    vmem_limit = int(min(max(2 * est, 4 * 1024 * 1024), 24 * 1024 * 1024))

    const2 = lambda i: (0, 0)  # grid-invariant -> DMA'd once, VMEM-resident

    out = pl.pallas_call(
        _mlp_kernel,
        out_shape=jax.ShapeDtypeStruct((B, n_actions), jnp.float32),
        grid=(nt,),
        in_specs=[
            pl.BlockSpec((tb, in_dims), lambda i: (i, 0)),
            pl.BlockSpec(w1.shape, const2),
            pl.BlockSpec(b1.shape, const2),
            pl.BlockSpec(w2.shape, const2),
            pl.BlockSpec(b2.shape, const2),
            pl.BlockSpec(w3.shape, const2),
            pl.BlockSpec(b3.shape, const2),
        ],
        out_specs=pl.BlockSpec((tb, n_actions), lambda i: (i, 0)),
        compiler_params=pltpu.CompilerParams(
            dimension_semantics=_batch_dim_semantics(multi_core),
            vmem_limit_bytes=vmem_limit,
        ),
    )(state, w1, b1, w2, b2, w3, b3)

    return out


def init_params(key, input_dims, fc1_dims, fc2_dims, n_actions):
    """Deterministic init mimicking nn.Linear default (U[-1/sqrt(fan_in), +])."""
    def linear(k, fan_in, fan_out):
        kw, kb = jax.random.split(k)
        bound = 1.0 / jnp.sqrt(fan_in)
        # Stored as [in, out] (transposed vs. PyTorch's [out, in]).
        w = jax.random.uniform(kw, (fan_in, fan_out), jnp.float32, -bound, bound)
        b = jax.random.uniform(kb, (fan_out,), jnp.float32, -bound, bound)
        return w, b

    k1, k2, k3 = jax.random.split(key, 3)
    w1, b1 = linear(k1, input_dims, fc1_dims)
    w2, b2 = linear(k2, fc1_dims, fc2_dims)
    w3, b3 = linear(k3, fc2_dims, n_actions)
    return {"w1": w1, "b1": b1, "w2": w2, "b2": b2, "w3": w3, "b3": b3}


def _reference(state, p, dtype=jnp.float32):
    """Plain-JAX forward matching the PyTorch module (same casts as kernel)."""
    x = state.astype(dtype)
    w1, w2, w3 = (p["w1"].astype(dtype), p["w2"].astype(dtype), p["w3"].astype(dtype))
    h1 = jnp.maximum(jnp.dot(x, w1, preferred_element_type=jnp.float32) + p["b1"], 0.0)
    h1 = h1.astype(dtype)
    h2 = jnp.maximum(jnp.dot(h1, w2, preferred_element_type=jnp.float32) + p["b2"], 0.0)
    h2 = h2.astype(dtype)
    return jnp.dot(h2, w3, preferred_element_type=jnp.float32) + p["b3"]


# TODO(synk): the Adam optimizer / training step of GenericNetwork is not part
# of forward() and is not implemented here (inference-only kernel).

if __name__ == "__main__":
    # CartPole-ish dims: obs=4, fc1=32, fc2=32, n_actions=2.
    input_dims, fc1_dims, fc2_dims, n_actions = 4, 32, 32, 2

    key = jax.random.PRNGKey(0)
    k_params, k_s1, k_s2 = jax.random.split(key, 3)
    params = init_params(k_params, input_dims, fc1_dims, fc2_dims, n_actions)

    # --- f32 path, tiny batch (single full-array block) ---------------------
    p32 = prepare_params(params, compute_dtype=jnp.float32)
    state_small = jax.random.normal(k_s1, (8, input_dims), jnp.float32)
    out_small = generic_network_forward(state_small, p32)
    jax.block_until_ready(out_small)
    ref_small = _reference(state_small, params, jnp.float32)
    assert out_small.shape == (8, n_actions)
    assert jnp.allclose(out_small, ref_small, atol=1e-5, rtol=1e-5)

    # --- f32 path, larger ragged batch, single tight tile -------------------
    state_big = jax.random.normal(k_s2, (300, input_dims), jnp.float32)
    out_big = generic_network_forward(state_big, p32)
    jax.block_until_ready(out_big)
    ref_big = _reference(state_big, params, jnp.float32)
    assert out_big.shape == (300, n_actions)
    assert jnp.allclose(out_big, ref_big, atol=1e-5, rtol=1e-5)

    # --- f32 path, multi-tile grid (exercises partial last block) -----------
    out_multi = generic_network_forward(state_big, p32, block_batch=128)
    jax.block_until_ready(out_multi)
    assert out_multi.shape == (300, n_actions)
    assert jnp.allclose(out_multi, ref_big, atol=1e-5, rtol=1e-5)

    # --- bf16 weights/activations (valid on v5e/v6e/v7x; f32 accumulate) ----
    p16 = prepare_params(params, compute_dtype=jnp.bfloat16)
    out_bf16 = generic_network_forward(state_big, p16)
    jax.block_until_ready(out_bf16)
    ref_bf16 = _reference(state_big, params, jnp.bfloat16)
    assert out_bf16.shape == (300, n_actions)
    assert jnp.allclose(out_bf16, ref_bf16, atol=1e-2, rtol=1e-2)

    print("KERNEL_OK")
</pallas_src>

<mosaic_0001>
module attributes {stable_mosaic.version = 11 : i64} {
  func.func @_mlp_kernel(%arg0: i32, %arg1: memref<8x4xf32, #tpu.memory_space<vmem>>, %arg2: memref<4x32xf32, #tpu.memory_space<vmem>>, %arg3: memref<1x32xf32, #tpu.memory_space<vmem>>, %arg4: memref<32x32xf32, #tpu.memory_space<vmem>>, %arg5: memref<1x32xf32, #tpu.memory_space<vmem>>, %arg6: memref<32x2xf32, #tpu.memory_space<vmem>>, %arg7: memref<1x2xf32, #tpu.memory_space<vmem>>, %arg8: memref<8x2xf32, #tpu.memory_space<vmem>>) attributes {dimension_semantics = [#tpu.dimension_semantics<parallel>], iteration_bounds = array<i64: 1>, scalar_prefetch = 0 : i64, scratch_operands = 0 : i64, tpu.core_type = #tpu.core_type<tc>, window_params = [{transform_indices = @transform_0, window_bounds = array<i64: 8, 4>}, {pipeline_mode = #tpu.pipeline_mode<synchronous>, transform_indices = @transform_1, window_bounds = array<i64: 4, 32>}, {pipeline_mode = #tpu.pipeline_mode<synchronous>, transform_indices = @transform_2, window_bounds = array<i64: 1, 32>}, {pipeline_mode = #tpu.pipeline_mode<synchronous>, transform_indices = @transform_3, window_bounds = array<i64: 32, 32>}, {pipeline_mode = #tpu.pipeline_mode<synchronous>, transform_indices = @transform_4, window_bounds = array<i64: 1, 32>}, {pipeline_mode = #tpu.pipeline_mode<synchronous>, transform_indices = @transform_5, window_bounds = array<i64: 32, 2>}, {pipeline_mode = #tpu.pipeline_mode<synchronous>, transform_indices = @transform_6, window_bounds = array<i64: 1, 2>}, {transform_indices = @transform_7, window_bounds = array<i64: 8, 2>}]} {
    %c0 = arith.constant 0 : index
    %c0_0 = arith.constant 0 : index
    %0 = vector.load %arg1[%c0, %c0_0] : memref<8x4xf32, #tpu.memory_space<vmem>>, vector<8x4xf32>
    %c0_1 = arith.constant 0 : index
    %c0_2 = arith.constant 0 : index
    %1 = vector.load %arg2[%c0_1, %c0_2] : memref<4x32xf32, #tpu.memory_space<vmem>>, vector<4x32xf32>
    %cst = arith.constant dense<0.000000e+00> : vector<8x32xf32>
    %2 = tpu.matmul %0, %1, %cst {dimension_numbers = #tpu.dot_dimension_numbers<[1], [0], [0], [1], [0, 0, 1, 1], [], []>} : vector<8x4xf32>, vector<4x32xf32>, vector<8x32xf32> -> vector<8x32xf32>
    %c0_3 = arith.constant 0 : index
    %c0_4 = arith.constant 0 : index
    %3 = vector.load %arg3[%c0_3, %c0_4] : memref<1x32xf32, #tpu.memory_space<vmem>>, vector<1x32xf32>
    %4 = vector.broadcast %3 : vector<1x32xf32> to vector<8x32xf32>
    %5 = arith.addf %2, %4 : vector<8x32xf32>
    %cst_5 = arith.constant 0.000000e+00 : f32
    %6 = vector.broadcast %cst_5 : f32 to vector<8x32xf32>
    %7 = arith.maximumf %5, %6 : vector<8x32xf32>
    %c0_6 = arith.constant 0 : index
    %c0_7 = arith.constant 0 : index
    %8 = vector.load %arg4[%c0_6, %c0_7] : memref<32x32xf32, #tpu.memory_space<vmem>>, vector<32x32xf32>
    %cst_8 = arith.constant dense<0.000000e+00> : vector<8x32xf32>
    %9 = tpu.matmul %7, %8, %cst_8 {dimension_numbers = #tpu.dot_dimension_numbers<[1], [0], [0], [1], [0, 0, 1, 1], [], []>} : vector<8x32xf32>, vector<32x32xf32>, vector<8x32xf32> -> vector<8x32xf32>
    %c0_9 = arith.constant 0 : index
    %c0_10 = arith.constant 0 : index
    %10 = vector.load %arg5[%c0_9, %c0_10] : memref<1x32xf32, #tpu.memory_space<vmem>>, vector<1x32xf32>
    %11 = vector.broadcast %10 : vector<1x32xf32> to vector<8x32xf32>
    %12 = arith.addf %9, %11 : vector<8x32xf32>
    %cst_11 = arith.constant 0.000000e+00 : f32
    %13 = vector.broadcast %cst_11 : f32 to vector<8x32xf32>
    %14 = arith.maximumf %12, %13 : vector<8x32xf32>
    %c0_12 = arith.constant 0 : index
    %c0_13 = arith.constant 0 : index
    %15 = vector.load %arg6[%c0_12, %c0_13] : memref<32x2xf32, #tpu.memory_space<vmem>>, vector<32x2xf32>
    %cst_14 = arith.constant dense<0.000000e+00> : vector<8x2xf32>
    %16 = tpu.matmul %14, %15, %cst_14 {dimension_numbers = #tpu.dot_dimension_numbers<[1], [0], [0], [1], [0, 0, 1, 1], [], []>} : vector<8x32xf32>, vector<32x2xf32>, vector<8x2xf32> -> vector<8x2xf32>
    %c0_15 = arith.constant 0 : index
    %c0_16 = arith.constant 0 : index
    %17 = vector.load %arg7[%c0_15, %c0_16] : memref<1x2xf32, #tpu.memory_space<vmem>>, vector<1x2xf32>
    %18 = vector.broadcast %17 : vector<1x2xf32> to vector<8x2xf32>
    %19 = arith.addf %16, %18 : vector<8x2xf32>
    %c0_17 = arith.constant 0 : index
    %c0_18 = arith.constant 0 : index
    %20 = vector.load %arg8[%c0_17, %c0_18] : memref<8x2xf32, #tpu.memory_space<vmem>>, vector<8x2xf32>
    tpu.vector_store %arg8[%c0_17, %c0_18], %19 {strides = array<i32>} : memref<8x2xf32, #tpu.memory_space<vmem>>, vector<8x2xf32>,
    return
  }
  func.func @transform_0(%arg0: i32) -> (i32, i32) {
    %c0_i32 = arith.constant 0 : i32
    %c0_i32_0 = arith.constant 0 : i32
    return %arg0, %c0_i32 : i32, i32
  }
  func.func @transform_1(%arg0: i32) -> (i32, i32) {
    %c0_i32 = arith.constant 0 : i32
    %c0_i32_0 = arith.constant 0 : i32
    %c0_i32_1 = arith.constant 0 : i32
    return %c0_i32, %c0_i32_0 : i32, i32
  }
  func.func @transform_2(%arg0: i32) -> (i32, i32) {
    %c0_i32 = arith.constant 0 : i32
    %c0_i32_0 = arith.constant 0 : i32
    %c0_i32_1 = arith.constant 0 : i32
    return %c0_i32, %c0_i32_0 : i32, i32
  }
  func.func @transform_3(%arg0: i32) -> (i32, i32) {
    %c0_i32 = arith.constant 0 : i32
    %c0_i32_0 = arith.constant 0 : i32
    %c0_i32_1 = arith.constant 0 : i32
    return %c0_i32, %c0_i32_0 : i32, i32
  }
  func.func @transform_4(%arg0: i32) -> (i32, i32) {
    %c0_i32 = arith.constant 0 : i32
    %c0_i32_0 = arith.constant 0 : i32
    %c0_i32_1 = arith.constant 0 : i32
    return %c0_i32, %c0_i32_0 : i32, i32
  }
  func.func @transform_5(%arg0: i32) -> (i32, i32) {
    %c0_i32 = arith.constant 0 : i32
    %c0_i32_0 = arith.constant 0 : i32
    %c0_i32_1 = arith.constant 0 : i32
    return %c0_i32, %c0_i32_0 : i32, i32
  }
  func.func @transform_6(%arg0: i32) -> (i32, i32) {
    %c0_i32 = arith.constant 0 : i32
    %c0_i32_0 = arith.constant 0 : i32
    %c0_i32_1 = arith.constant 0 : i32
    return %c0_i32, %c0_i32_0 : i32, i32
  }
  func.func @transform_7(%arg0: i32) -> (i32, i32) {
    %c0_i32 = arith.constant 0 : i32
    %c0_i32_0 = arith.constant 0 : i32
    return %arg0, %c0_i32 : i32, i32
  }
}

</mosaic_0001>

<llo_original>
// kernel: generic_network_forward.1
$region0: #{generic_network_forward.1}
  #allocation0 [shape = 'u32[]', space=smem, size = 0x4, offset = 0x4, fixed_abs, tag = 'smem constant byte address 0x4 - core index']
  #allocation1 [shape = 'u32[72,128]{1,0:T(1,128)}', space=vmem, size = 0x9000, scoped, tag = 'internal scratch']
  %s0 = inlined_call_operand.vmem [shape: f32[8,4], index: 0, kind: input, shape index: {}]
  %s1 = inlined_call_operand.vmem [shape: f32[4,32], index: 1, kind: input, shape index: {}]
  %s2 = inlined_call_operand.vmem [shape: f32[1,32], index: 2, kind: input, shape index: {}]
  %s3 = inlined_call_operand.vmem [shape: f32[32,32], index: 3, kind: input, shape index: {}]
  %s4 = inlined_call_operand.vmem [shape: f32[1,32], index: 4, kind: input, shape index: {}]
  %s5 = inlined_call_operand.vmem [shape: f32[32,2], index: 5, kind: input, shape index: {}]
  %s6 = inlined_call_operand.vmem [shape: f32[1,2], index: 6, kind: input, shape index: {}]
  %s7 = inlined_call_operand.vmem [shape: f32[8,2], index: 7, kind: output, shape index: {}]
  %s8 = sld [smem:[#allocation0]]
  $region38: #{generic_network_forward.1} parent=0
    _
  %s10 = ssub.s32 1, %s8
  %s11 = scalar_select 0, %s10, %s8
  // Predicated region
  $region2: #{generic_network_forward.1} parent=0 // pred_check
    _
  $region3: #{generic_network_forward.1} parent=0 // pred_check_branch
    %13 = sbr.rel (0) target = $region5
  $region4: #{generic_network_forward.1} parent=0 // pred_region
    _
  $region5: #{generic_network_forward.1} parent=0 // pred_fallthru
    _
  // Predicated region
  $region6: #{generic_network_forward.1} parent=0 // pred_check
    _
  $region7: #{generic_network_forward.1} parent=0 // pred_check_branch
    %15 = sbr.rel (0) target = $region9
  $region8: #{generic_network_forward.1} parent=0 // pred_region
    _
  $region9: #{generic_network_forward.1} parent=0 // pred_fallthru
    _
  // Predicated region
  $region10: #{generic_network_forward.1} parent=0 // pred_check
    _
  $region11: #{generic_network_forward.1} parent=0 // pred_check_branch
    %17 = sbr.rel (0) target = $region13
  $region12: #{generic_network_forward.1} parent=0 // pred_region
    _
  $region13: #{generic_network_forward.1} parent=0 // pred_fallthru
    _
  // Predicated region
  $region14: #{generic_network_forward.1} parent=0 // pred_check
    _
  $region15: #{generic_network_forward.1} parent=0 // pred_check_branch
    %19 = sbr.rel (0) target = $region17
  $region16: #{generic_network_forward.1} parent=0 // pred_region
    _
  $region17: #{generic_network_forward.1} parent=0 // pred_fallthru
    _
  // Predicated region
  $region18: #{generic_network_forward.1} parent=0 // pred_check
    _
  $region19: #{generic_network_forward.1} parent=0 // pred_check_branch
    %21 = sbr.rel (0) target = $region21
  $region20: #{generic_network_forward.1} parent=0 // pred_region
    _
  $region21: #{generic_network_forward.1} parent=0 // pred_fallthru
    _
  // Predicated region
  $region22: #{generic_network_forward.1} parent=0 // pred_check
    _
  $region23: #{generic_network_forward.1} parent=0 // pred_check_branch
    %23 = sbr.rel (0) target = $region25
  $region24: #{generic_network_forward.1} parent=0 // pred_region
    _
  $region25: #{generic_network_forward.1} parent=0 // pred_fallthru
    _
  // Predicated region
  $region26: #{generic_network_forward.1} parent=0 // pred_check
    _
  $region27: #{generic_network_forward.1} parent=0 // pred_check_branch
    %25 = sbr.rel (0) target = $region29
  $region28: #{generic_network_forward.1} parent=0 // pred_region
    _
  $region29: #{generic_network_forward.1} parent=0 // pred_fallthru
    _
  %v26 = vld [vmem:[%s0] sm:$0xff]
  %v27 = vld [vmem:[%s1] sm:$0xf]
  %v28 = vld [vmem:[%s2] sm:$0x1]
  %v30 = vperm.slane %v28, 0
  %vm32 = vcmask 31744
  %v34 = vsel %vm32, %v26, 0
  %vm36 = vcmask 1043456
  %v38 = vsel %vm36, %v27, 0
  %40 = vmatpush.msra.mxu0 0.0
  %41 = vmatpush.msra.mxu0 0.0
  %42 = vmatpush.msra.mxu0 0.0
  %43 = vmatpush.msra.mxu0 0.0
  %44 = vmatpush.msra.mxu0 0.0
  %45 = vmatpush.msra.mxu0 0.0
  %46 = vmatpush.msra.mxu0 0.0
  %47 = vmatpush.msra.mxu0 0.0
  %48 = vmatpush.msra.mxu0 0.0
  %49 = vmatpush.msra.mxu0 0.0
  %50 = vmatpush.msra.mxu0 0.0
  %51 = vmatpush.msra.mxu0 0.0
  %52 = vmatpush.msra.mxu0 0.0
  %53 = vmatpush.msra.mxu0 0.0
  %54 = vmatpush.msra.mxu0 0.0
  %55 = vmatpush.msra.mxu0 %v38
  %56 = vmatmul.f32.gmra.mxu0 %v34
  %v57 = vpop.f32.mrf.mxu0
  %v58 = vadd.f32 %v30, %v57
  %59 = vdwg.mxu0
  %v60 = vmax.f32 %v58, 0.0
  %v61 = vld [vmem:[%s3] sm:$0xff]
  %v62 = vld [vmem:[%s3 + $0x8] sm:$0xff]
  %v63 = vld [vmem:[%s3 + $0x10] sm:$0xff]
  %v64 = vld [vmem:[%s3 + $0x18] sm:$0xff]
  %v65 = vld [vmem:[%s4] sm:$0x1]
  %v67 = vperm.slane %v65, 0
  %vm69 = vcmask 261120
  %v71 = vsel %vm69, %v60, 0
  %73 = vmatpush.msra.mxu0 0.0
  %74 = vmatpush.msra.mxu0 0.0
  %75 = vmatpush.msra.mxu0 0.0
  %76 = vmatpush.msra.mxu0 0.0
  %77 = vmatpush.msra.mxu0 0.0
  %78 = vmatpush.msra.mxu0 0.0
  %79 = vmatpush.msra.mxu0 0.0
  %80 = vmatpush.msra.mxu0 0.0
  %81 = vmatpush.msra.mxu0 0.0
  %82 = vmatpush.msra.mxu0 0.0
  %83 = vmatpush.msra.mxu0 0.0
  %84 = vmatpush.msra.mxu0 0.0
  %85 = vmatpush.msra.mxu0 %v64
  %86 = vmatpush.msra.mxu0 %v63
  %87 = vmatpush.msra.mxu0 %v62
  %88 = vmatpush.msra.mxu0 %v61
  %89 = vmatmul.f32.gmra.mxu0 %v71
  %v90 = vpop.f32.mrf.mxu0
  %v91 = vadd.f32 %v67, %v90
  %92 = vdwg.mxu0
  %v93 = vmax.f32 %v91, 0.0
  %v94 = vld [vmem:[%s5] sm:$0xff]
  %v95 = vld [vmem:[%s5 + $0x8] sm:$0xff]
  %v96 = vld [vmem:[%s5 + $0x10] sm:$0xff]
  %v97 = vld [vmem:[%s5 + $0x18] sm:$0xff]
  %v98 = vld [vmem:[%s6] sm:$0x1]
  %v100 = vperm.slane %v98, 0
  %v103 = vsel %vm69, %v93, 0
  %105 = vmatpush.msra.mxu0 0.0
  %106 = vmatpush.msra.mxu0 0.0
  %107 = vmatpush.msra.mxu0 0.0
  %108 = vmatpush.msra.mxu0 0.0
  %109 = vmatpush.msra.mxu0 0.0
  %110 = vmatpush.msra.mxu0 0.0
  %111 = vmatpush.msra.mxu0 0.0
  %112 = vmatpush.msra.mxu0 0.0
  %113 = vmatpush.msra.mxu0 0.0
  %114 = vmatpush.msra.mxu0 0.0
  %115 = vmatpush.msra.mxu0 0.0
  %116 = vmatpush.msra.mxu0 0.0
  %117 = vmatpush.msra.mxu0 %v97
  %118 = vmatpush.msra.mxu0 %v96
  %119 = vmatpush.msra.mxu0 %v95
  %120 = vmatpush.msra.mxu0 %v94
  %121 = vmatmul.f32.gmra.mxu0 %v103
  %v122 = vpop.f32.mrf.mxu0
  %v123 = vadd.f32 %v100, %v122
  %124 = vdwg.mxu0
  %vm125 = vcmask 15360
  %126 = vst.msk [vmem:[%s7] sm:$0xff] %vm125, %v123
  // Predicated region
  $region30: #{generic_network_forward.1} parent=0 // pred_check
    _
  $region31: #{generic_network_forward.1} parent=0 // pred_check_branch
    %128 = sbr.rel (0) target = $region33
  $region32: #{generic_network_forward.1} parent=0 // pred_region
    _
  $region33: #{generic_network_forward.1} parent=0 // pred_fallthru
    _
  // Predicated region
  $region34: #{generic_network_forward.1} parent=0 // pred_check
    _
  $region35: #{generic_network_forward.1} parent=0 // pred_check_branch
    %130 = sbr.rel (0) target = $region37
  $region36: #{generic_network_forward.1} parent=0 // pred_region
    _
  $region37: #{generic_network_forward.1} parent=0 // pred_fallthru
    _

</llo_original>
